<compile_context>
chip_gen: v5e
topology: v5e:2x2
jax: 0.10.0
libtpu: 0.0.40
codegen_flags: <defaults>
</compile_context>

<pallas_src>
import functools

import jax
import jax.numpy as jnp
from jax.experimental import pallas as pl
from jax.experimental.pallas import tpu as pltpu

LANE = 128     # lane width (last-dim alignment for the padded feature dims)
SUBLANE = 8    # f32 sublane alignment (second-to-last dim / batch tiles)
MAX_TB = 1024  # max batch-tile rows (review: 512-1024 amortizes step overhead)


def _round_up(x, m):
    return (x + m - 1) // m * m


def _pad_to(a, shape):
    pads = [(0, t - s) for s, t in zip(a.shape, shape)]
    return jnp.pad(a, pads)


def mlp_kernel(x_ref, w1_ref, b1_ref, w2_ref, b2_ref, w3_ref, b3_ref, o_ref):
    # Layer 1: Linear + ReLU (bf16 MXU operands, f32 accumulation & elementwise).
    x = x_ref[...].astype(jnp.bfloat16)
    h = jnp.dot(x, w1_ref[...], preferred_element_type=jnp.float32)
    h = jnp.maximum(h + b1_ref[...], 0.0)
    # Layer 2: Linear + ReLU
    h = jnp.dot(h.astype(jnp.bfloat16), w2_ref[...],
                preferred_element_type=jnp.float32)
    h = jnp.maximum(h + b2_ref[...], 0.0)
    # Layer 3 (output): Linear, no activation; bf16 writeback (lane-dense tile).
    out = jnp.dot(h.astype(jnp.bfloat16), w3_ref[...],
                  preferred_element_type=jnp.float32)
    o_ref[...] = (out + b3_ref[...]).astype(o_ref.dtype)


def prepare_params(params):
    """Pad hidden/output feature dims to multiples of 128 and cast weights to bf16.

    params = (w1, b1, w2, b2, w3, b3), wi laid out [in, out], bi [1, out].
    The K dim of w1 (n_inputs) is left unpadded (matches unpadded x).
    Padded columns/rows are zero so the sliced output equals unpadded math.
    """
    w1, b1, w2, b2, w3, b3 = params
    k_in = w1.shape[0]                    # n_inputs, unpadded
    h_pad = _round_up(w1.shape[1], LANE)  # padded hidden width
    o_pad = _round_up(w3.shape[1], LANE)  # padded output features
    w1p = _pad_to(w1, (k_in, h_pad)).astype(jnp.bfloat16)
    w2p = _pad_to(w2, (h_pad, h_pad)).astype(jnp.bfloat16)
    w3p = _pad_to(w3, (h_pad, o_pad)).astype(jnp.bfloat16)
    b1p = _pad_to(b1, (1, h_pad)).astype(jnp.float32)
    b2p = _pad_to(b2, (1, h_pad)).astype(jnp.float32)
    b3p = _pad_to(b3, (1, o_pad)).astype(jnp.float32)
    return w1p, b1p, w2p, b2p, w3p, b3p


def _choose_batch_tile(batch):
    """Pick (tb, bp): sublane-aligned batch tile and padded batch.

    * tb capped at MAX_TB (big tiles amortize ~0.35us/step pipeline overhead).
    * When the batch is large enough, force >= 2 tiles so the "parallel" grid
      axis can be sharded across both TensorCores on v7x.
    """
    if batch <= 2 * SUBLANE:
        tb = _round_up(max(batch, 1), SUBLANE)
        return tb, tb
    tb = min(MAX_TB, _round_up(pl.cdiv(batch, 2), SUBLANE))
    bp = _round_up(batch, tb)
    return tb, bp


@functools.partial(jax.jit, static_argnames=("n_outputs",))
def net_forward(x, padded_params, n_outputs):
    """Fused MLP forward.  x: [batch, n_inputs] f32.  Returns [batch, n_outputs] bf16."""
    w1, b1, w2, b2, w3, b3 = padded_params
    batch = x.shape[0]
    k_in = w1.shape[0]
    h_pad = w2.shape[0]
    o_pad = w3.shape[1]
    assert x.shape[1] == k_in

    tb, bp = _choose_batch_tile(batch)
    x_pad = x.astype(jnp.float32)
    if bp != batch:
        x_pad = _pad_to(x_pad, (bp, k_in))

    weight_bytes = sum(int(p.size) * p.dtype.itemsize
                       for p in (w1, b1, w2, b2, w3, b3))
    cost = pl.CostEstimate(
        flops=2 * bp * (k_in * h_pad + h_pad * h_pad + h_pad * o_pad),
        transcendentals=0,
        bytes_accessed=bp * k_in * 4 + bp * o_pad * 2 + weight_bytes,
    )

    out = pl.pallas_call(
        mlp_kernel,
        out_shape=jax.ShapeDtypeStruct((bp, o_pad), jnp.bfloat16),
        grid=(bp // tb,),
        in_specs=[
            # activations: one batch tile per grid step (double-buffered),
            # K dim unpadded (= full array dim, legal for BlockSpec).
            pl.BlockSpec((tb, k_in), lambda i: (i, 0)),
            # weights/biases: constant index_map -> fetched once, VMEM-resident.
            pl.BlockSpec(w1.shape, lambda i: (0, 0)),
            pl.BlockSpec(b1.shape, lambda i: (0, 0)),
            pl.BlockSpec(w2.shape, lambda i: (0, 0)),
            pl.BlockSpec(b2.shape, lambda i: (0, 0)),
            pl.BlockSpec(w3.shape, lambda i: (0, 0)),
            pl.BlockSpec(b3.shape, lambda i: (0, 0)),
        ],
        out_specs=pl.BlockSpec((tb, o_pad), lambda i: (i, 0)),
        compiler_params=pltpu.CompilerParams(
            dimension_semantics=("parallel",),   # shard batch tiles across TCs (v7x)
        ),
        cost_estimate=cost,
    )(x_pad, w1, b1, w2, b2, w3, b3)

    return out[:batch, :n_outputs]


def init_params(key, sizes):
    """PyTorch-style Linear init: W ~ U(-1/sqrt(fan_in), 1/sqrt(fan_in)), stored
    (out, in) then transposed to (in, out) for the kernel; b as (1, out)."""
    params = []
    for i in range(len(sizes) - 1):
        fan_in, fan_out = sizes[i], sizes[i + 1]
        key, kw, kb = jax.random.split(key, 3)
        bound = 1.0 / jnp.sqrt(fan_in)
        w = jax.random.uniform(kw, (fan_out, fan_in), jnp.float32, -bound, bound)
        b = jax.random.uniform(kb, (fan_out,), jnp.float32, -bound, bound)
        params.append((w.T, b.reshape(1, fan_out)))
    (w1, b1), (w2, b2), (w3, b3) = params
    return w1, b1, w2, b2, w3, b3


def reference_forward_f32(x, params):
    w1, b1, w2, b2, w3, b3 = params
    h = jnp.maximum(x @ w1 + b1, 0.0)
    h = jnp.maximum(h @ w2 + b2, 0.0)
    return h @ w3 + b3


def reference_forward_bf16(x, padded_params, n_outputs):
    """Same bf16-weight / f32-accumulate / bf16-output arithmetic as the kernel."""
    w1, b1, w2, b2, w3, b3 = padded_params
    xb = x.astype(jnp.float32).astype(jnp.bfloat16)
    h = jnp.maximum(
        jnp.dot(xb, w1, preferred_element_type=jnp.float32) + b1, 0.0)
    h = jnp.maximum(
        jnp.dot(h.astype(jnp.bfloat16), w2, preferred_element_type=jnp.float32) + b2, 0.0)
    out = jnp.dot(h.astype(jnp.bfloat16), w3, preferred_element_type=jnp.float32) + b3
    return out.astype(jnp.bfloat16)[:, :n_outputs]


if __name__ == "__main__":
    # Shapes consistent with the module: args.n_layers=2, args.n_hiddens=32
    n_inputs, n_hiddens, n_layers, n_outputs = 32, 32, 2, 10
    sizes = [n_inputs] + [n_hiddens] * n_layers + [n_outputs]

    key = jax.random.PRNGKey(0)
    key, kx = jax.random.split(key)
    params = init_params(key, sizes)
    padded_params = prepare_params(params)

    # --- small-batch check (batch=2, single grid step, padded to 8 rows) ---
    x = jax.random.normal(kx, (2, n_inputs), jnp.float32)
    out = jax.block_until_ready(net_forward(x, padded_params, n_outputs))
    assert out.shape == (2, n_outputs)
    ref_bf16 = reference_forward_bf16(x, padded_params, n_outputs)
    ref_f32 = reference_forward_f32(x, params)
    assert jnp.allclose(out.astype(jnp.float32), ref_bf16.astype(jnp.float32),
                        atol=2e-2, rtol=2e-2)
    assert jnp.allclose(out.astype(jnp.float32), ref_f32, atol=1e-1, rtol=1e-1)

    # --- multi-tile check (batch=260 -> tb=136, 2 tiles, exercises batch pad) ---
    key, kx2 = jax.random.split(key)
    x2 = jax.random.normal(kx2, (260, n_inputs), jnp.float32)
    out2 = jax.block_until_ready(net_forward(x2, padded_params, n_outputs))
    assert out2.shape == (260, n_outputs)
    ref2 = reference_forward_bf16(x2, padded_params, n_outputs)
    assert jnp.allclose(out2.astype(jnp.float32), ref2.astype(jnp.float32),
                        atol=2e-2, rtol=2e-2)

    # TODO(synk): observe()/select_samples_*/project2cone2 (MIQP/QP solvers,
    # gradient bookkeeping) are training-time host logic with no Pallas
    # equivalent; only forward() is implemented as a kernel.
    print("KERNEL_OK")
</pallas_src>

<mosaic_0001>
module attributes {stable_mosaic.version = 11 : i64} {
  func.func @mlp_kernel(%arg0: i32, %arg1: memref<8x32xf32, #tpu.memory_space<vmem>>, %arg2: memref<32x128xbf16, #tpu.memory_space<vmem>>, %arg3: memref<1x128xf32, #tpu.memory_space<vmem>>, %arg4: memref<128x128xbf16, #tpu.memory_space<vmem>>, %arg5: memref<1x128xf32, #tpu.memory_space<vmem>>, %arg6: memref<128x128xbf16, #tpu.memory_space<vmem>>, %arg7: memref<1x128xf32, #tpu.memory_space<vmem>>, %arg8: memref<8x128xbf16, #tpu.memory_space<vmem>>) attributes {dimension_semantics = [#tpu.dimension_semantics<parallel>], iteration_bounds = array<i64: 1>, scalar_prefetch = 0 : i64, scratch_operands = 0 : i64, tpu.core_type = #tpu.core_type<tc>, window_params = [{transform_indices = @transform_0, window_bounds = array<i64: 8, 32>}, {pipeline_mode = #tpu.pipeline_mode<synchronous>, transform_indices = @transform_1, window_bounds = array<i64: 32, 128>}, {pipeline_mode = #tpu.pipeline_mode<synchronous>, transform_indices = @transform_2, window_bounds = array<i64: 1, 128>}, {pipeline_mode = #tpu.pipeline_mode<synchronous>, transform_indices = @transform_3, window_bounds = array<i64: 128, 128>}, {pipeline_mode = #tpu.pipeline_mode<synchronous>, transform_indices = @transform_4, window_bounds = array<i64: 1, 128>}, {pipeline_mode = #tpu.pipeline_mode<synchronous>, transform_indices = @transform_5, window_bounds = array<i64: 128, 128>}, {pipeline_mode = #tpu.pipeline_mode<synchronous>, transform_indices = @transform_6, window_bounds = array<i64: 1, 128>}, {transform_indices = @transform_7, window_bounds = array<i64: 8, 128>}]} {
    %c0 = arith.constant 0 : index
    %c0_0 = arith.constant 0 : index
    %0 = vector.load %arg1[%c0, %c0_0] : memref<8x32xf32, #tpu.memory_space<vmem>>, vector<8x32xf32>
    %1 = arith.truncf %0 : vector<8x32xf32> to vector<8x32xbf16>
    %c0_1 = arith.constant 0 : index
    %c0_2 = arith.constant 0 : index
    %2 = vector.load %arg2[%c0_1, %c0_2] : memref<32x128xbf16, #tpu.memory_space<vmem>>, vector<32x128xbf16>
    %cst = arith.constant dense<0.000000e+00> : vector<8x128xf32>
    %3 = tpu.matmul %1, %2, %cst {dimension_numbers = #tpu.dot_dimension_numbers<[1], [0], [0], [1], [0, 0, 1, 1], [], []>} : vector<8x32xbf16>, vector<32x128xbf16>, vector<8x128xf32> -> vector<8x128xf32>
    %c0_3 = arith.constant 0 : index
    %c0_4 = arith.constant 0 : index
    %4 = vector.load %arg3[%c0_3, %c0_4] : memref<1x128xf32, #tpu.memory_space<vmem>>, vector<1x128xf32>
    %5 = vector.broadcast %4 : vector<1x128xf32> to vector<8x128xf32>
    %6 = arith.addf %3, %5 : vector<8x128xf32>
    %cst_5 = arith.constant 0.000000e+00 : f32
    %7 = vector.broadcast %cst_5 : f32 to vector<8x128xf32>
    %8 = arith.maximumf %6, %7 : vector<8x128xf32>
    %9 = arith.truncf %8 : vector<8x128xf32> to vector<8x128xbf16>
    %c0_6 = arith.constant 0 : index
    %c0_7 = arith.constant 0 : index
    %10 = vector.load %arg4[%c0_6, %c0_7] : memref<128x128xbf16, #tpu.memory_space<vmem>>, vector<128x128xbf16>
    %cst_8 = arith.constant dense<0.000000e+00> : vector<8x128xf32>
    %11 = tpu.matmul %9, %10, %cst_8 {dimension_numbers = #tpu.dot_dimension_numbers<[1], [0], [0], [1], [0, 0, 1, 1], [], []>} : vector<8x128xbf16>, vector<128x128xbf16>, vector<8x128xf32> -> vector<8x128xf32>
    %c0_9 = arith.constant 0 : index
    %c0_10 = arith.constant 0 : index
    %12 = vector.load %arg5[%c0_9, %c0_10] : memref<1x128xf32, #tpu.memory_space<vmem>>, vector<1x128xf32>
    %13 = vector.broadcast %12 : vector<1x128xf32> to vector<8x128xf32>
    %14 = arith.addf %11, %13 : vector<8x128xf32>
    %cst_11 = arith.constant 0.000000e+00 : f32
    %15 = vector.broadcast %cst_11 : f32 to vector<8x128xf32>
    %16 = arith.maximumf %14, %15 : vector<8x128xf32>
    %17 = arith.truncf %16 : vector<8x128xf32> to vector<8x128xbf16>
    %c0_12 = arith.constant 0 : index
    %c0_13 = arith.constant 0 : index
    %18 = vector.load %arg6[%c0_12, %c0_13] : memref<128x128xbf16, #tpu.memory_space<vmem>>, vector<128x128xbf16>
    %cst_14 = arith.constant dense<0.000000e+00> : vector<8x128xf32>
    %19 = tpu.matmul %17, %18, %cst_14 {dimension_numbers = #tpu.dot_dimension_numbers<[1], [0], [0], [1], [0, 0, 1, 1], [], []>} : vector<8x128xbf16>, vector<128x128xbf16>, vector<8x128xf32> -> vector<8x128xf32>
    %c0_15 = arith.constant 0 : index
    %c0_16 = arith.constant 0 : index
    %20 = vector.load %arg7[%c0_15, %c0_16] : memref<1x128xf32, #tpu.memory_space<vmem>>, vector<1x128xf32>
    %21 = vector.broadcast %20 : vector<1x128xf32> to vector<8x128xf32>
    %22 = arith.addf %19, %21 : vector<8x128xf32>
    %23 = arith.truncf %22 : vector<8x128xf32> to vector<8x128xbf16>
    %c0_17 = arith.constant 0 : index
    %c0_18 = arith.constant 0 : index
    %24 = vector.load %arg8[%c0_17, %c0_18] : memref<8x128xbf16, #tpu.memory_space<vmem>>, vector<8x128xbf16>
    tpu.vector_store %arg8[%c0_17, %c0_18], %23 {strides = array<i32>} : memref<8x128xbf16, #tpu.memory_space<vmem>>, vector<8x128xbf16>,
    return
  }
  func.func @transform_0(%arg0: i32) -> (i32, i32) {
    %c0_i32 = arith.constant 0 : i32
    %c0_i32_0 = arith.constant 0 : i32
    return %arg0, %c0_i32 : i32, i32
  }
  func.func @transform_1(%arg0: i32) -> (i32, i32) {
    %c0_i32 = arith.constant 0 : i32
    %c0_i32_0 = arith.constant 0 : i32
    %c0_i32_1 = arith.constant 0 : i32
    return %c0_i32, %c0_i32_0 : i32, i32
  }
  func.func @transform_2(%arg0: i32) -> (i32, i32) {
    %c0_i32 = arith.constant 0 : i32
    %c0_i32_0 = arith.constant 0 : i32
    %c0_i32_1 = arith.constant 0 : i32
    return %c0_i32, %c0_i32_0 : i32, i32
  }
  func.func @transform_3(%arg0: i32) -> (i32, i32) {
    %c0_i32 = arith.constant 0 : i32
    %c0_i32_0 = arith.constant 0 : i32
    %c0_i32_1 = arith.constant 0 : i32
    return %c0_i32, %c0_i32_0 : i32, i32
  }
  func.func @transform_4(%arg0: i32) -> (i32, i32) {
    %c0_i32 = arith.constant 0 : i32
    %c0_i32_0 = arith.constant 0 : i32
    %c0_i32_1 = arith.constant 0 : i32
    return %c0_i32, %c0_i32_0 : i32, i32
  }
  func.func @transform_5(%arg0: i32) -> (i32, i32) {
    %c0_i32 = arith.constant 0 : i32
    %c0_i32_0 = arith.constant 0 : i32
    %c0_i32_1 = arith.constant 0 : i32
    return %c0_i32, %c0_i32_0 : i32, i32
  }
  func.func @transform_6(%arg0: i32) -> (i32, i32) {
    %c0_i32 = arith.constant 0 : i32
    %c0_i32_0 = arith.constant 0 : i32
    %c0_i32_1 = arith.constant 0 : i32
    return %c0_i32, %c0_i32_0 : i32, i32
  }
  func.func @transform_7(%arg0: i32) -> (i32, i32) {
    %c0_i32 = arith.constant 0 : i32
    %c0_i32_0 = arith.constant 0 : i32
    return %arg0, %c0_i32 : i32, i32
  }
}

</mosaic_0001>

<llo_original>
// kernel: net_forward.1
$region0: #{net_forward.1}
  #allocation0 [shape = 'u32[]', space=smem, size = 0x4, offset = 0x4, fixed_abs, tag = 'smem constant byte address 0x4 - core index']
  #allocation1 [shape = 'u32[72,128]{1,0:T(1,128)}', space=vmem, size = 0x9000, scoped, tag = 'internal scratch']
  %s0 = inlined_call_operand.vmem [shape: f32[8,32], index: 0, kind: input, shape index: {}]
  %s1 = inlined_call_operand.hbm [shape: bf16[32,128], index: 1, kind: input, shape index: {}]
  %s2 = inlined_call_operand.vmem [shape: f32[1,128], index: 2, kind: input, shape index: {}]
  %s3 = inlined_call_operand.hbm [shape: bf16[128,128], index: 3, kind: input, shape index: {}]
  %s4 = inlined_call_operand.vmem [shape: f32[1,128], index: 4, kind: input, shape index: {}]
  %s5 = inlined_call_operand.hbm [shape: bf16[128,128], index: 5, kind: input, shape index: {}]
  %s6 = inlined_call_operand.vmem [shape: f32[1,128], index: 6, kind: input, shape index: {}]
  %s7 = inlined_call_operand.vmem [shape: bf16[8,128], index: 7, kind: output, shape index: {}]
  %s8 = sld [smem:[#allocation0]]
  $region50: #{net_forward.1} parent=0
    _
  %s10 = ssub.s32 1, %s8
  %s11 = scalar_select 0, %s10, %s8
  $region1: #{net_forward.1} parent=0
    #allocation2 [shape = 'u8[8192]{0}', space=vmem, size = 0x2000, scoped, tag = 'input window, operand 1, single buffered']
    #allocation3 [shape = 's32[1]{0}', space=sflag, size = 0x4, scoped, tag = 'scoped memory for net_forward.1']
    #allocation4 [shape = 'u8[32768]{0}', space=vmem, size = 0x8000, scoped, tag = 'input window, operand 3, single buffered']
    #allocation5 [shape = 's32[1]{0}', space=sflag, size = 0x4, scoped, tag = 'scoped memory for net_forward.1']
    #allocation6 [shape = 'u8[32768]{0}', space=vmem, size = 0x8000, scoped, tag = 'input window, operand 5, single buffered']
    %12 = vsyncpa [#allocation3], 0
    %13 = vsyncpa [#allocation5], 0
    // Predicated region
    $region2: #{net_forward.1} parent=1 // pred_check
      _
    $region3: #{net_forward.1} parent=1 // pred_check_branch
      %15 = sbr.rel (0) target = $region5
    $region4: #{net_forward.1} parent=1 // pred_region
      _
    $region5: #{net_forward.1} parent=1 // pred_fallthru
      _
    // Predicated region
    $region6: #{net_forward.1} parent=1 // pred_check
      _
    $region7: #{net_forward.1} parent=1 // pred_check_branch
      %17 = sbr.rel (0) target = $region9
    $region8: #{net_forward.1} parent=1 // pred_region
      %19 = vsyncadd [#allocation3], 0
      %s20 = sshll.u32 %s1, 4
      %s21 = int_to_ptr.hbm [resolvable:$true] %s20
      %s22 = sshll.u32 [#allocation2], 4
      %s23 = int_to_ptr.vmem [resolvable:$true] %s22
      %28 = dma.hbm_to_vmem [thread:$0]  %s21, 256, %s23, [#allocation3], 64, 64, 4
    $region9: #{net_forward.1} parent=1 // pred_fallthru
      _
    // Predicated region
    $region10: #{net_forward.1} parent=1 // pred_check
      _
    $region11: #{net_forward.1} parent=1 // pred_check_branch
      %30 = sbr.rel (0) target = $region13
    $region12: #{net_forward.1} parent=1 // pred_region
      _
    $region13: #{net_forward.1} parent=1 // pred_fallthru
      _
    // Predicated region
    $region14: #{net_forward.1} parent=1 // pred_check
      _
    $region15: #{net_forward.1} parent=1 // pred_check_branch
      %32 = sbr.rel (0) target = $region17
    $region16: #{net_forward.1} parent=1 // pred_region
      %34 = vsyncadd [#allocation5], 0
      %s35 = sshll.u32 %s3, 4
      %s36 = int_to_ptr.hbm [resolvable:$true] %s35
      %s37 = sshll.u32 [#allocation4], 4
      %s38 = int_to_ptr.vmem [resolvable:$true] %s37
      %43 = dma.hbm_to_vmem [thread:$0]  %s36, 1024, %s38, [#allocation5], 64, 64, 4
    $region17: #{net_forward.1} parent=1 // pred_fallthru
      _
    // Predicated region
    $region18: #{net_forward.1} parent=1 // pred_check
      _
    $region19: #{net_forward.1} parent=1 // pred_check_branch
      %45 = sbr.rel (0) target = $region21
    $region20: #{net_forward.1} parent=1 // pred_region
      _
    $region21: #{net_forward.1} parent=1 // pred_fallthru
      _
    // Predicated region
    $region22: #{net_forward.1} parent=1 // pred_check
      _
    $region23: #{net_forward.1} parent=1 // pred_check_branch
      %47 = sbr.rel (0) target = $region25
    $region24: #{net_forward.1} parent=1 // pred_region
      %49 = vsyncadd [#allocation5], 0
      %s50 = sshll.u32 %s5, 4
      %s51 = int_to_ptr.hbm [resolvable:$true] %s50
      %s52 = sshll.u32 [#allocation6], 4
      %s53 = int_to_ptr.vmem [resolvable:$true] %s52
      %58 = dma.hbm_to_vmem [thread:$0]  %s51, 1024, %s53, [#allocation5], 64, 64, 4
    $region25: #{net_forward.1} parent=1 // pred_fallthru
      _
    // Predicated region
    $region26: #{net_forward.1} parent=1 // pred_check
      _
    $region27: #{net_forward.1} parent=1 // pred_check_branch
      %60 = sbr.rel (0) target = $region29
    $region28: #{net_forward.1} parent=1 // pred_region
      _
    $region29: #{net_forward.1} parent=1 // pred_fallthru
      _
    // Predicated region
    $region30: #{net_forward.1} parent=1 // pred_check
      _
    $region31: #{net_forward.1} parent=1 // pred_check_branch
      %62 = sbr.rel (0) target = $region33
    $region32: #{net_forward.1} parent=1 // pred_region
      %64 = dma.done [#allocation3], 256
    $region33: #{net_forward.1} parent=1 // pred_fallthru
      _
    // Predicated region
    $region34: #{net_forward.1} parent=1 // pred_check
      _
    $region35: #{net_forward.1} parent=1 // pred_check_branch
      %66 = sbr.rel (0) target = $region37
    $region36: #{net_forward.1} parent=1 // pred_region
      %68 = dma.done [#allocation5], 1024
    $region37: #{net_forward.1} parent=1 // pred_fallthru
      _
    // Predicated region
    $region38: #{net_forward.1} parent=1 // pred_check
      _
    $region39: #{net_forward.1} parent=1 // pred_check_branch
      %70 = sbr.rel (0) target = $region41
    $region40: #{net_forward.1} parent=1 // pred_region
      %72 = dma.done [#allocation5], 1024
    $region41: #{net_forward.1} parent=1 // pred_fallthru
      _
    %v74 = vld [vmem:[%s0] sm:$0xff]
    %v75 = vpack.c.bf16 %v74, %v74
    %v76 = vld [vmem:[#allocation2] sm:$0xf]
    %v77 = vld [vmem:[#allocation2 + $0x4] sm:$0xf]
    %v78 = vld [vmem:[#allocation2 + $0x8] sm:$0xf]
    %v79 = vld [vmem:[#allocation2 + $0xc] sm:$0xf]
    %v80 = vld [vmem:[%s2] sm:$0x1]
    %v82 = vperm.slane %v80, 0
    %v88 = vunpack.c.l.b16 %v76
    %v89 = vunpack.c.l.b16 %v77
    %v90 = vunpack.c.l.b16 %v78
    %v91 = vunpack.c.l.b16 %v79
    %v92 = vpack.c.b16 %v89, %v88
    %v93 = vpack.c.b16 %v91, %v90
    %vm96 = vcmask 261120
    %v98 = vsel %vm96, %v75, 0
    %100 = vmatpush.bf16.msra.mxu0 0
    %101 = vmatpush.bf16.msra.mxu0 0
    %102 = vmatpush.bf16.msra.mxu0 0
    %103 = vmatpush.bf16.msra.mxu0 0
    %104 = vmatpush.bf16.msra.mxu0 0
    %105 = vmatpush.bf16.msra.mxu0 0
    %106 = vmatpush.bf16.msra.mxu0 %v93
    %107 = vmatpush.bf16.msra.mxu0 %v92
    %108 = vmatmul.bf16.gmra.mxu0 %v98
    %v109 = vpop.f32.mrf.mxu0
    %v110 = vadd.f32 %v82, %v109
    %v111 = vpop.f32.mrf.mxu0
    %112 = vdwg.mxu0
    %v113 = vmax.f32 %v110, 0.0
    %v114 = vpack.c.bf16 %v113, %v113
    %v115 = vld [vmem:[#allocation4] sm:$0xf]
    %v116 = vld [vmem:[#allocation4 + $0x4] sm:$0xf]
    %v117 = vld [vmem:[#allocation4 + $0x8] sm:$0xf]
    %v118 = vld [vmem:[#allocation4 + $0xc] sm:$0xf]
    %v119 = vld [vmem:[#allocation4 + $0x10] sm:$0xf]
    %v120 = vld [vmem:[#allocation4 + $0x14] sm:$0xf]
    %v121 = vld [vmem:[#allocation4 + $0x18] sm:$0xf]
    %v122 = vld [vmem:[#allocation4 + $0x1c] sm:$0xf]
    %v123 = vld [vmem:[#allocation4 + $0x20] sm:$0xf]
    %v124 = vld [vmem:[#allocation4 + $0x24] sm:$0xf]
    %v125 = vld [vmem:[#allocation4 + $0x28] sm:$0xf]
    %v126 = vld [vmem:[#allocation4 + $0x2c] sm:$0xf]
    %v127 = vld [vmem:[#allocation4 + $0x30] sm:$0xf]
    %v128 = vld [vmem:[#allocation4 + $0x34] sm:$0xf]
    %v129 = vld [vmem:[#allocation4 + $0x38] sm:$0xf]
    %v130 = vld [vmem:[#allocation4 + $0x3c] sm:$0xf]
    %v131 = vld [vmem:[%s4] sm:$0x1]
    %v133 = vperm.slane %v131, 0
    %v151 = vunpack.c.l.b16 %v115
    %v152 = vunpack.c.l.b16 %v116
    %v153 = vunpack.c.l.b16 %v117
    %v154 = vunpack.c.l.b16 %v118
    %v155 = vunpack.c.l.b16 %v119
    %v156 = vunpack.c.l.b16 %v120
    %v157 = vunpack.c.l.b16 %v121
    %v158 = vunpack.c.l.b16 %v122
    %v159 = vunpack.c.l.b16 %v123
    %v160 = vunpack.c.l.b16 %v124
    %v161 = vunpack.c.l.b16 %v125
    %v162 = vunpack.c.l.b16 %v126
    %v163 = vunpack.c.l.b16 %v127
    %v164 = vunpack.c.l.b16 %v128
    %v165 = vunpack.c.l.b16 %v129
    %v166 = vunpack.c.l.b16 %v130
    %v167 = vpack.c.b16 %v152, %v151
    %v168 = vpack.c.b16 %v154, %v153
    %v169 = vpack.c.b16 %v156, %v155
    %v170 = vpack.c.b16 %v158, %v157
    %v171 = vpack.c.b16 %v160, %v159
    %v172 = vpack.c.b16 %v162, %v161
    %v173 = vpack.c.b16 %v164, %v163
    %v174 = vpack.c.b16 %v166, %v165
    %183 = vmatpush.bf16.msra.mxu0 %v174
    %184 = vmatpush.bf16.msra.mxu0 %v173
    %185 = vmatpush.bf16.msra.mxu0 %v172
    %186 = vmatpush.bf16.msra.mxu0 %v171
    %187 = vmatpush.bf16.msra.mxu0 %v170
    %188 = vmatpush.bf16.msra.mxu0 %v169
    %189 = vmatpush.bf16.msra.mxu0 %v168
    %190 = vmatpush.bf16.msra.mxu0 %v167
    %191 = vmatmul.bf16.gmra.mxu0 %v114
    %v192 = vpop.f32.mrf.mxu0
    %v193 = vadd.f32 %v133, %v192
    %v194 = vpop.f32.mrf.mxu0
    %195 = vdwg.mxu0
    %v196 = vmax.f32 %v193, 0.0
    %v197 = vpack.c.bf16 %v196, %v196
    %v198 = vld [vmem:[#allocation6] sm:$0xf]
    %v199 = vld [vmem:[#allocation6 + $0x4] sm:$0xf]
    %v200 = vld [vmem:[#allocation6 + $0x8] sm:$0xf]
    %v201 = vld [vmem:[#allocation6 + $0xc] sm:$0xf]
    %v202 = vld [vmem:[#allocation6 + $0x10] sm:$0xf]
    %v203 = vld [vmem:[#allocation6 + $0x14] sm:$0xf]
    %v204 = vld [vmem:[#allocation6 + $0x18] sm:$0xf]
    %v205 = vld [vmem:[#allocation6 + $0x1c] sm:$0xf]
    %v206 = vld [vmem:[#allocation6 + $0x20] sm:$0xf]
    %v207 = vld [vmem:[#allocation6 + $0x24] sm:$0xf]
    %v208 = vld [vmem:[#allocation6 + $0x28] sm:$0xf]
    %v209 = vld [vmem:[#allocation6 + $0x2c] sm:$0xf]
    %v210 = vld [vmem:[#allocation6 + $0x30] sm:$0xf]
    %v211 = vld [vmem:[#allocation6 + $0x34] sm:$0xf]
    %v212 = vld [vmem:[#allocation6 + $0x38] sm:$0xf]
    %v213 = vld [vmem:[#allocation6 + $0x3c] sm:$0xf]
    %v214 = vld [vmem:[%s6] sm:$0x1]
    %v216 = vperm.slane %v214, 0
    %v234 = vunpack.c.l.b16 %v198
    %v235 = vunpack.c.l.b16 %v199
    %v236 = vunpack.c.l.b16 %v200
    %v237 = vunpack.c.l.b16 %v201
    %v238 = vunpack.c.l.b16 %v202
    %v239 = vunpack.c.l.b16 %v203
    %v240 = vunpack.c.l.b16 %v204
    %v241 = vunpack.c.l.b16 %v205
    %v242 = vunpack.c.l.b16 %v206
    %v243 = vunpack.c.l.b16 %v207
    %v244 = vunpack.c.l.b16 %v208
    %v245 = vunpack.c.l.b16 %v209
    %v246 = vunpack.c.l.b16 %v210
    %v247 = vunpack.c.l.b16 %v211
    %v248 = vunpack.c.l.b16 %v212
    %v249 = vunpack.c.l.b16 %v213
    %v250 = vpack.c.b16 %v235, %v234
    %v251 = vpack.c.b16 %v237, %v236
    %v252 = vpack.c.b16 %v239, %v238
    %v253 = vpack.c.b16 %v241, %v240
    %v254 = vpack.c.b16 %v243, %v242
    %v255 = vpack.c.b16 %v245, %v244
    %v256 = vpack.c.b16 %v247, %v246
    %v257 = vpack.c.b16 %v249, %v248
    %266 = vmatpush.bf16.msra.mxu0 %v257
    %267 = vmatpush.bf16.msra.mxu0 %v256
    %268 = vmatpush.bf16.msra.mxu0 %v255
    %269 = vmatpush.bf16.msra.mxu0 %v254
    %270 = vmatpush.bf16.msra.mxu0 %v253
    %271 = vmatpush.bf16.msra.mxu0 %v252
    %272 = vmatpush.bf16.msra.mxu0 %v251
    %273 = vmatpush.bf16.msra.mxu0 %v250
    %274 = vmatmul.bf16.gmra.mxu0 %v197
    %v275 = vpop.f32.mrf.mxu0
    %v276 = vadd.f32 %v216, %v275
    %v277 = vpop.f32.mrf.mxu0
    %278 = vdwg.mxu0
    %v279 = vpack.c.bf16 %v276, %v276
    %280 = vst [vmem:[%s7] sm:$0xf] %v279
    // Predicated region
    $region42: #{net_forward.1} parent=1 // pred_check
      _
    $region43: #{net_forward.1} parent=1 // pred_check_branch
      %282 = sbr.rel (0) target = $region45
    $region44: #{net_forward.1} parent=1 // pred_region
      _
    $region45: #{net_forward.1} parent=1 // pred_fallthru
      _
    // Predicated region
    $region46: #{net_forward.1} parent=1 // pred_check
      _
    $region47: #{net_forward.1} parent=1 // pred_check_branch
      %284 = sbr.rel (0) target = $region49
    $region48: #{net_forward.1} parent=1 // pred_region
      _
    $region49: #{net_forward.1} parent=1 // pred_fallthru
      _
    %285 = vsyncpa [#allocation3], 1
    %286 = vsyncpa [#allocation5], 1

</llo_original>
